<compile_context>
chip_gen: v7x
topology: tpu7x:2x2x1
jax: 0.10.0
libtpu: 0.0.40
codegen_flags: <defaults>
</compile_context>

<pallas_src>
import jax
import jax.numpy as jnp
from jax import lax
from jax.experimental import pallas as pl
from jax.experimental.pallas import tpu as pltpu


def _round_up(x, m):
    return (x + m - 1) // m * m


def mlp_kernel(x_ref, w1_ref, b1_ref, w2_ref, b2_ref, o_ref):
    """o^T = W2 @ relu(W1 @ x^T + b1) + b2 for one batch tile.

    x_ref:  (TM, K)      batch tile (row-major, as stored in HBM)
    w1_ref: (Hp, K)      fc1 weight, PyTorch layout, hidden padded to Hp
    b1_ref: (Hp, 1)      fc1 bias (column)
    w2_ref: (O, Hp)      fc2 weight, PyTorch layout
    b2_ref: (O, 1)       fc2 bias (column)
    o_ref:  (O, TM)      transposed output tile -> lane-dense store
    """
    x = x_ref[...]
    b1 = b1_ref[...]          # hoisted single reads (no per-iter re-broadcast)
    b2 = b2_ref[...]

    # fc1: h^T = W1 @ x^T  -> (Hp, TM); contraction over K on the MXU, f32 acc.
    h = lax.dot_general(
        w1_ref[...], x,
        dimension_numbers=(((1,), (1,)), ((), ())),
        preferred_element_type=jnp.float32,
    )
    h = jnp.maximum(h + b1, 0.0)          # bias + ReLU on the VPU, full-lane f32

    # fc2: y^T = W2 @ h^T  -> (O, TM)
    y = jnp.dot(w2_ref[...], h, preferred_element_type=jnp.float32)
    o_ref[...] = (y + b2).astype(o_ref.dtype)


def atmospheric_density_nn(x, w1, b1, w2, b2, *, block_m=4096):
    """Forward pass: relu(x @ w1.T + b1) @ w2.T + b2 (PyTorch-layout weights).

    x:  (batch, input_dim)
    w1: (hidden_dim, input_dim),  b1: (hidden_dim,)
    w2: (output_dim, hidden_dim), b2: (output_dim,)
    """
    batch, in_dim = x.shape
    hidden = w1.shape[0]
    out_dim = w2.shape[0]
    dtype = x.dtype

    # --- Pad hidden_dim to a lane multiple (zero rows/cols are mathematically inert).
    hp = _round_up(hidden, 128)
    w1p = jnp.pad(w1.astype(dtype), ((0, hp - hidden), (0, 0)))
    b1p = jnp.pad(b1.astype(dtype).reshape(hidden, 1), ((0, hp - hidden), (0, 0)))
    w2p = jnp.pad(w2.astype(dtype), ((0, 0), (0, hp - hidden)))
    b2c = b2.astype(dtype).reshape(out_dim, 1)

    # --- Tile the batch; pad to a tile multiple (>=128 so the output lane axis is dense).
    block_m = _round_up(block_m, 128)
    tm = min(block_m, _round_up(batch, 128))
    bp = _round_up(batch, tm)
    xp = x if bp == batch else jnp.pad(x, ((0, bp - batch), (0, 0)))

    out_t = pl.pallas_call(
        mlp_kernel,
        out_shape=jax.ShapeDtypeStruct((out_dim, bp), dtype),
        grid_spec=pltpu.PrefetchScalarGridSpec(
            num_scalar_prefetch=0,
            grid=(bp // tm,),
            in_specs=[
                pl.BlockSpec((tm, in_dim), lambda i: (i, 0)),    # x tile (pipelined)
                pl.BlockSpec((hp, in_dim), lambda i: (0, 0)),    # W1 (VMEM-resident)
                pl.BlockSpec((hp, 1), lambda i: (0, 0)),         # b1 (resident)
                pl.BlockSpec((out_dim, hp), lambda i: (0, 0)),   # W2 (resident)
                pl.BlockSpec((out_dim, 1), lambda i: (0, 0)),    # b2 (resident)
            ],
            out_specs=pl.BlockSpec((out_dim, tm), lambda i: (0, i)),
        ),
        compiler_params=pltpu.CompilerParams(
            # Batch tiles are independent -> shard across TensorCores on v7x.
            dimension_semantics=("parallel",),
        ),
    )(xp, w1p, b1p, w2p, b2c)

    # (out_dim, padded_batch) -> (batch, out_dim); tiny wrapper-side transpose.
    return out_t[:, :batch].T


def init_params(key, input_dim, hidden_dim, output_dim, dtype=jnp.float32):
    """PyTorch nn.Linear default init: U[-1/sqrt(fan_in), +1/sqrt(fan_in)],
    weights stored in PyTorch (out_features, in_features) layout."""
    k1, k2, k3, k4 = jax.random.split(key, 4)
    bound1 = 1.0 / jnp.sqrt(input_dim)
    bound2 = 1.0 / jnp.sqrt(hidden_dim)
    w1 = jax.random.uniform(k1, (hidden_dim, input_dim), dtype, -bound1, bound1)
    b1 = jax.random.uniform(k2, (hidden_dim,), dtype, -bound1, bound1)
    w2 = jax.random.uniform(k3, (output_dim, hidden_dim), dtype, -bound2, bound2)
    b2 = jax.random.uniform(k4, (output_dim,), dtype, -bound2, bound2)
    return w1, b1, w2, b2


if __name__ == "__main__":
    input_dim, hidden_dim, output_dim = 16, 32, 8
    batch = 8   # NOTE: at this toy size overhead dominates; kernel pays off at large batch.

    key = jax.random.PRNGKey(0)
    kx, kp = jax.random.split(key)
    x = jax.random.normal(kx, (batch, input_dim), jnp.float32)
    w1, b1, w2, b2 = init_params(kp, input_dim, hidden_dim, output_dim)

    out = atmospheric_density_nn(x, w1, b1, w2, b2)
    out = jax.block_until_ready(out)

    # Pure-JAX reference (same semantics as the PyTorch forward).
    ref = jnp.maximum(x @ w1.T + b1, 0.0) @ w2.T + b2
    assert out.shape == (batch, output_dim)
    assert jnp.allclose(out, ref, atol=1e-5, rtol=1e-5)

    print("KERNEL_OK")
</pallas_src>

<mosaic_0001>
module attributes {stable_mosaic.version = 11 : i64} {
  func.func @mlp_kernel(%arg0: i32, %arg1: memref<128x16xf32, #tpu.memory_space<vmem>>, %arg2: memref<128x16xf32, #tpu.memory_space<vmem>>, %arg3: memref<128x1xf32, #tpu.memory_space<vmem>>, %arg4: memref<8x128xf32, #tpu.memory_space<vmem>>, %arg5: memref<8x1xf32, #tpu.memory_space<vmem>>, %arg6: memref<8x128xf32, #tpu.memory_space<vmem>>) attributes {dimension_semantics = [#tpu.dimension_semantics<parallel>], iteration_bounds = array<i64: 1>, scalar_prefetch = 0 : i64, scratch_operands = 0 : i64, tpu.core_type = #tpu.core_type<tc>, window_params = [{transform_indices = @transform_0, window_bounds = array<i64: 128, 16>}, {pipeline_mode = #tpu.pipeline_mode<synchronous>, transform_indices = @transform_1, window_bounds = array<i64: 128, 16>}, {pipeline_mode = #tpu.pipeline_mode<synchronous>, transform_indices = @transform_2, window_bounds = array<i64: 128, 1>}, {pipeline_mode = #tpu.pipeline_mode<synchronous>, transform_indices = @transform_3, window_bounds = array<i64: 8, 128>}, {pipeline_mode = #tpu.pipeline_mode<synchronous>, transform_indices = @transform_4, window_bounds = array<i64: 8, 1>}, {transform_indices = @transform_5, window_bounds = array<i64: 8, 128>}]} {
    %c0 = arith.constant 0 : index
    %c0_0 = arith.constant 0 : index
    %0 = vector.load %arg1[%c0, %c0_0] : memref<128x16xf32, #tpu.memory_space<vmem>>, vector<128x16xf32>
    %c0_1 = arith.constant 0 : index
    %c0_2 = arith.constant 0 : index
    %1 = vector.load %arg3[%c0_1, %c0_2] : memref<128x1xf32, #tpu.memory_space<vmem>>, vector<128x1xf32>
    %c0_3 = arith.constant 0 : index
    %c0_4 = arith.constant 0 : index
    %2 = vector.load %arg5[%c0_3, %c0_4] : memref<8x1xf32, #tpu.memory_space<vmem>>, vector<8x1xf32>
    %c0_5 = arith.constant 0 : index
    %c0_6 = arith.constant 0 : index
    %3 = vector.load %arg2[%c0_5, %c0_6] : memref<128x16xf32, #tpu.memory_space<vmem>>, vector<128x16xf32>
    %cst = arith.constant dense<0.000000e+00> : vector<128x128xf32>
    %4 = tpu.matmul %3, %0, %cst {dimension_numbers = #tpu.dot_dimension_numbers<[1], [1], [0], [0], [0, 0, 1, 0], [], []>} : vector<128x16xf32>, vector<128x16xf32>, vector<128x128xf32> -> vector<128x128xf32>
    %5 = vector.broadcast %1 : vector<128x1xf32> to vector<128x128xf32>
    %6 = arith.addf %4, %5 : vector<128x128xf32>
    %cst_7 = arith.constant 0.000000e+00 : f32
    %7 = vector.broadcast %cst_7 : f32 to vector<128x128xf32>
    %8 = arith.maximumf %6, %7 : vector<128x128xf32>
    %c0_8 = arith.constant 0 : index
    %c0_9 = arith.constant 0 : index
    %9 = vector.load %arg4[%c0_8, %c0_9] : memref<8x128xf32, #tpu.memory_space<vmem>>, vector<8x128xf32>
    %cst_10 = arith.constant dense<0.000000e+00> : vector<8x128xf32>
    %10 = tpu.matmul %9, %8, %cst_10 {dimension_numbers = #tpu.dot_dimension_numbers<[1], [0], [0], [1], [0, 0, 1, 1], [], []>} : vector<8x128xf32>, vector<128x128xf32>, vector<8x128xf32> -> vector<8x128xf32>
    %11 = vector.broadcast %2 : vector<8x1xf32> to vector<8x128xf32>
    %12 = arith.addf %10, %11 : vector<8x128xf32>
    %c0_11 = arith.constant 0 : index
    %c0_12 = arith.constant 0 : index
    %13 = vector.load %arg6[%c0_11, %c0_12] : memref<8x128xf32, #tpu.memory_space<vmem>>, vector<8x128xf32>
    tpu.vector_store %arg6[%c0_11, %c0_12], %12 {strides = array<i32>} : memref<8x128xf32, #tpu.memory_space<vmem>>, vector<8x128xf32>,
    return
  }
  func.func @transform_0(%arg0: i32) -> (i32, i32) {
    %c0_i32 = arith.constant 0 : i32
    %c0_i32_0 = arith.constant 0 : i32
    return %arg0, %c0_i32 : i32, i32
  }
  func.func @transform_1(%arg0: i32) -> (i32, i32) {
    %c0_i32 = arith.constant 0 : i32
    %c0_i32_0 = arith.constant 0 : i32
    %c0_i32_1 = arith.constant 0 : i32
    return %c0_i32, %c0_i32_0 : i32, i32
  }
  func.func @transform_2(%arg0: i32) -> (i32, i32) {
    %c0_i32 = arith.constant 0 : i32
    %c0_i32_0 = arith.constant 0 : i32
    %c0_i32_1 = arith.constant 0 : i32
    return %c0_i32, %c0_i32_0 : i32, i32
  }
  func.func @transform_3(%arg0: i32) -> (i32, i32) {
    %c0_i32 = arith.constant 0 : i32
    %c0_i32_0 = arith.constant 0 : i32
    %c0_i32_1 = arith.constant 0 : i32
    return %c0_i32, %c0_i32_0 : i32, i32
  }
  func.func @transform_4(%arg0: i32) -> (i32, i32) {
    %c0_i32 = arith.constant 0 : i32
    %c0_i32_0 = arith.constant 0 : i32
    %c0_i32_1 = arith.constant 0 : i32
    return %c0_i32, %c0_i32_0 : i32, i32
  }
  func.func @transform_5(%arg0: i32) -> (i32, i32) {
    %c0_i32 = arith.constant 0 : i32
    %c0_i32_0 = arith.constant 0 : i32
    return %c0_i32, %arg0 : i32, i32
  }
}

</mosaic_0001>

<llo_original>
// kernel: tpu_custom_call.1
$region0: #{tpu_custom_call.1}
  #allocation0 [shape = 'u32[]', space=smem, size = 0x4, offset = 0x4, fixed_abs, tag = 'smem constant byte address 0x4 - core index']
  #allocation1 [shape = 'u32[144,128]{1,0:T(1,128)}', space=vmem, size = 0x12000, scoped, tag = 'internal scratch']
  %s0 = inlined_call_operand.vmem [shape: f32[128,16], index: 0, kind: input, shape index: {}]
  %s1 = inlined_call_operand.vmem [shape: f32[128,16], index: 1, kind: input, shape index: {}]
  %s2 = inlined_call_operand.vmem [shape: f32[128,1], index: 2, kind: input, shape index: {}]
  %s3 = inlined_call_operand.vmem [shape: f32[8,128], index: 3, kind: input, shape index: {}]
  %s4 = inlined_call_operand.vmem [shape: f32[8,1], index: 4, kind: input, shape index: {}]
  %s5 = inlined_call_operand.hbm [shape: f32[8,128], index: 5, kind: output, shape index: {}]
  %s6 = sld [smem:[#allocation0]]
  $region30: #{tpu_custom_call.1} parent=0
    _
  %s8 = ssub.s32 1, %s6
  %s9 = scalar_select 0, %s8, %s6
  $region1: #{tpu_custom_call.1} parent=0
    #allocation2 [shape = 'u8[4096]{0}', space=vmem, size = 0x1000, scoped, tag = 'output window, operand 0, single buffered']
    #allocation3 [shape = 's32[1]{0}', space=sflag, size = 0x4, scoped, tag = 'scoped memory for tpu_custom_call.1']
    %10 = vsyncpa [#allocation3], 0
    // Predicated region
    $region2: #{tpu_custom_call.1} parent=1 // pred_check
      _
    $region3: #{tpu_custom_call.1} parent=1 // pred_check_branch
      %12 = sbr.rel (0) target = $region5
    $region4: #{tpu_custom_call.1} parent=1 // pred_region
      _
    $region5: #{tpu_custom_call.1} parent=1 // pred_fallthru
      _
    // Predicated region
    $region6: #{tpu_custom_call.1} parent=1 // pred_check
      _
    $region7: #{tpu_custom_call.1} parent=1 // pred_check_branch
      %14 = sbr.rel (0) target = $region9
    $region8: #{tpu_custom_call.1} parent=1 // pred_region
      _
    $region9: #{tpu_custom_call.1} parent=1 // pred_fallthru
      _
    // Predicated region
    $region10: #{tpu_custom_call.1} parent=1 // pred_check
      _
    $region11: #{tpu_custom_call.1} parent=1 // pred_check_branch
      %16 = sbr.rel (0) target = $region13
    $region12: #{tpu_custom_call.1} parent=1 // pred_region
      _
    $region13: #{tpu_custom_call.1} parent=1 // pred_fallthru
      _
    // Predicated region
    $region14: #{tpu_custom_call.1} parent=1 // pred_check
      _
    $region15: #{tpu_custom_call.1} parent=1 // pred_check_branch
      %18 = sbr.rel (0) target = $region17
    $region16: #{tpu_custom_call.1} parent=1 // pred_region
      _
    $region17: #{tpu_custom_call.1} parent=1 // pred_fallthru
      _
    // Predicated region
    $region18: #{tpu_custom_call.1} parent=1 // pred_check
      _
    $region19: #{tpu_custom_call.1} parent=1 // pred_check_branch
      %20 = sbr.rel (0) target = $region21
    $region20: #{tpu_custom_call.1} parent=1 // pred_region
      _
    $region21: #{tpu_custom_call.1} parent=1 // pred_fallthru
      _
    %v21 = vld [vmem:[%s0] sm:$0xff]
    %v22 = vld [vmem:[%s0 + $0x8] sm:$0xff]
    %v23 = vld [vmem:[%s0 + $0x10] sm:$0xff]
    %v24 = vld [vmem:[%s0 + $0x18] sm:$0xff]
    %v25 = vld [vmem:[%s0 + $0x20] sm:$0xff]
    %v26 = vld [vmem:[%s0 + $0x28] sm:$0xff]
    %v27 = vld [vmem:[%s0 + $0x30] sm:$0xff]
    %v28 = vld [vmem:[%s0 + $0x38] sm:$0xff]
    %v29 = vld [vmem:[%s0 + $0x40] sm:$0xff]
    %v30 = vld [vmem:[%s0 + $0x48] sm:$0xff]
    %v31 = vld [vmem:[%s0 + $0x50] sm:$0xff]
    %v32 = vld [vmem:[%s0 + $0x58] sm:$0xff]
    %v33 = vld [vmem:[%s0 + $0x60] sm:$0xff]
    %v34 = vld [vmem:[%s0 + $0x68] sm:$0xff]
    %v35 = vld [vmem:[%s0 + $0x70] sm:$0xff]
    %v36 = vld [vmem:[%s0 + $0x78] sm:$0xff]
    %v37 = vld [vmem:[%s2] sm:$0xff]
    %v38 = vld [vmem:[%s2 + $0x8] sm:$0xff]
    %v39 = vld [vmem:[%s2 + $0x10] sm:$0xff]
    %v40 = vld [vmem:[%s2 + $0x18] sm:$0xff]
    %v41 = vld [vmem:[%s2 + $0x20] sm:$0xff]
    %v42 = vld [vmem:[%s2 + $0x28] sm:$0xff]
    %v43 = vld [vmem:[%s2 + $0x30] sm:$0xff]
    %v44 = vld [vmem:[%s2 + $0x38] sm:$0xff]
    %v45 = vld [vmem:[%s2 + $0x40] sm:$0xff]
    %v46 = vld [vmem:[%s2 + $0x48] sm:$0xff]
    %v47 = vld [vmem:[%s2 + $0x50] sm:$0xff]
    %v48 = vld [vmem:[%s2 + $0x58] sm:$0xff]
    %v49 = vld [vmem:[%s2 + $0x60] sm:$0xff]
    %v50 = vld [vmem:[%s2 + $0x68] sm:$0xff]
    %v51 = vld [vmem:[%s2 + $0x70] sm:$0xff]
    %v52 = vld [vmem:[%s2 + $0x78] sm:$0xff]
    %v53 = vld [vmem:[%s4] sm:$0xff]
    %v54 = vld [vmem:[%s1] sm:$0xff]
    %v55 = vld [vmem:[%s1 + $0x8] sm:$0xff]
    %v56 = vld [vmem:[%s1 + $0x10] sm:$0xff]
    %v57 = vld [vmem:[%s1 + $0x18] sm:$0xff]
    %v58 = vld [vmem:[%s1 + $0x20] sm:$0xff]
    %v59 = vld [vmem:[%s1 + $0x28] sm:$0xff]
    %v60 = vld [vmem:[%s1 + $0x30] sm:$0xff]
    %v61 = vld [vmem:[%s1 + $0x38] sm:$0xff]
    %v62 = vld [vmem:[%s1 + $0x40] sm:$0xff]
    %v63 = vld [vmem:[%s1 + $0x48] sm:$0xff]
    %v64 = vld [vmem:[%s1 + $0x50] sm:$0xff]
    %v65 = vld [vmem:[%s1 + $0x58] sm:$0xff]
    %v66 = vld [vmem:[%s1 + $0x60] sm:$0xff]
    %v67 = vld [vmem:[%s1 + $0x68] sm:$0xff]
    %v68 = vld [vmem:[%s1 + $0x70] sm:$0xff]
    %v69 = vld [vmem:[%s1 + $0x78] sm:$0xff]
    %71 = vset.pattern.permute.xlu0 0
    %72 = vperm.xlu0 %71, %v37
    %v73 = vpop.permute.xlu0 %72
    %76 = vset.pattern.permute.xlu0 0
    %77 = vperm.xlu0 %76, %v38
    %v78 = vpop.permute.xlu0 %77
    %81 = vset.pattern.permute.xlu0 0
    %82 = vperm.xlu0 %81, %v39
    %v83 = vpop.permute.xlu0 %82
    %86 = vset.pattern.permute.xlu0 0
    %87 = vperm.xlu0 %86, %v40
    %v88 = vpop.permute.xlu0 %87
    %91 = vset.pattern.permute.xlu0 0
    %92 = vperm.xlu0 %91, %v41
    %v93 = vpop.permute.xlu0 %92
    %96 = vset.pattern.permute.xlu0 0
    %97 = vperm.xlu0 %96, %v42
    %v98 = vpop.permute.xlu0 %97
    %101 = vset.pattern.permute.xlu0 0
    %102 = vperm.xlu0 %101, %v43
    %v103 = vpop.permute.xlu0 %102
    %106 = vset.pattern.permute.xlu0 0
    %107 = vperm.xlu0 %106, %v44
    %v108 = vpop.permute.xlu0 %107
    %111 = vset.pattern.permute.xlu0 0
    %112 = vperm.xlu0 %111, %v45
    %v113 = vpop.permute.xlu0 %112
    %116 = vset.pattern.permute.xlu0 0
    %117 = vperm.xlu0 %116, %v46
    %v118 = vpop.permute.xlu0 %117
    %121 = vset.pattern.permute.xlu0 0
    %122 = vperm.xlu0 %121, %v47
    %v123 = vpop.permute.xlu0 %122
    %126 = vset.pattern.permute.xlu0 0
    %127 = vperm.xlu0 %126, %v48
    %v128 = vpop.permute.xlu0 %127
    %131 = vset.pattern.permute.xlu0 0
    %132 = vperm.xlu0 %131, %v49
    %v133 = vpop.permute.xlu0 %132
    %136 = vset.pattern.permute.xlu0 0
    %137 = vperm.xlu0 %136, %v50
    %v138 = vpop.permute.xlu0 %137
    %141 = vset.pattern.permute.xlu0 0
    %142 = vperm.xlu0 %141, %v51
    %v143 = vpop.permute.xlu0 %142
    %146 = vset.pattern.permute.xlu0 0
    %147 = vperm.xlu0 %146, %v52
    %v148 = vpop.permute.xlu0 %147
    %vm150 = vcmask 130048
    %v152 = vsel %vm150, %v54, 0
    %v155 = vsel %vm150, %v55, 0
    %v158 = vsel %vm150, %v56, 0
    %v161 = vsel %vm150, %v57, 0
    %v164 = vsel %vm150, %v58, 0
    %v167 = vsel %vm150, %v59, 0
    %v170 = vsel %vm150, %v60, 0
    %v173 = vsel %vm150, %v61, 0
    %v176 = vsel %vm150, %v62, 0
    %v179 = vsel %vm150, %v63, 0
    %v182 = vsel %vm150, %v64, 0
    %v185 = vsel %vm150, %v65, 0
    %v188 = vsel %vm150, %v66, 0
    %v191 = vsel %vm150, %v67, 0
    %v194 = vsel %vm150, %v68, 0
    %v197 = vsel %vm150, %v69, 0
    %v200 = vsel %vm150, %v21, 0
    %v203 = vsel %vm150, %v22, 0
    %v206 = vsel %vm150, %v23, 0
    %v209 = vsel %vm150, %v24, 0
    %v212 = vsel %vm150, %v25, 0
    %v215 = vsel %vm150, %v26, 0
    %v218 = vsel %vm150, %v27, 0
    %v221 = vsel %vm150, %v28, 0
    %v224 = vsel %vm150, %v29, 0
    %v227 = vsel %vm150, %v30, 0
    %v230 = vsel %vm150, %v31, 0
    %v233 = vsel %vm150, %v32, 0
    %v236 = vsel %vm150, %v33, 0
    %v239 = vsel %vm150, %v34, 0
    %v242 = vsel %vm150, %v35, 0
    %v245 = vsel %vm150, %v36, 0
    %247 = vmatprep.subr.mxu0 0.0
    %248 = vmatpush1.xpose.msra.mxu0 %v200
    %249 = vmatprep.subr.mxu0 0.0
    %250 = vmatpush1.xpose.msra.mxu0 %v203
    %251 = vmatprep.subr.mxu0 0.0
    %252 = vmatpush1.xpose.msra.mxu0 %v206
    %253 = vmatprep.subr.mxu0 0.0
    %254 = vmatpush1.xpose.msra.mxu0 %v209
    %255 = vmatprep.subr.mxu0 0.0
    %256 = vmatpush1.xpose.msra.mxu0 %v212
    %257 = vmatprep.subr.mxu0 0.0
    %258 = vmatpush1.xpose.msra.mxu0 %v215
    %259 = vmatprep.subr.mxu0 0.0
    %260 = vmatpush1.xpose.msra.mxu0 %v218
    %261 = vmatprep.subr.mxu0 0.0
    %262 = vmatpush1.xpose.msra.mxu0 %v221
    %263 = vmatprep.subr.mxu0 0.0
    %264 = vmatpush1.xpose.msra.mxu0 %v224
    %265 = vmatprep.subr.mxu0 0.0
    %266 = vmatpush1.xpose.msra.mxu0 %v227
    %267 = vmatprep.subr.mxu0 0.0
    %268 = vmatpush1.xpose.msra.mxu0 %v230
    %269 = vmatprep.subr.mxu0 0.0
    %270 = vmatpush1.xpose.msra.mxu0 %v233
    %271 = vmatprep.subr.mxu0 0.0
    %272 = vmatpush1.xpose.msra.mxu0 %v236
    %273 = vmatprep.subr.mxu0 0.0
    %274 = vmatpush1.xpose.msra.mxu0 %v239
    %275 = vmatprep.subr.mxu0 0.0
    %276 = vmatpush1.xpose.msra.mxu0 %v242
    %277 = vmatprep.subr.mxu0 0.0
    %278 = vmatpush1.xpose.msra.mxu0 %v245
    %279 = vmatprep.subr.mxu0 0.0
    %280 = vmatpush1.xpose.msra.mxu0 0.0
    %281 = vmatprep.subr.mxu0 0.0
    %282 = vmatpush1.xpose.msra.mxu0 0.0
    %283 = vmatprep.subr.mxu0 0.0
    %284 = vmatpush1.xpose.msra.mxu0 0.0
    %285 = vmatprep.subr.mxu0 0.0
    %286 = vmatpush1.xpose.msra.mxu0 0.0
    %287 = vmatprep.subr.mxu0 0.0
    %288 = vmatpush1.xpose.msra.mxu0 0.0
    %289 = vmatprep.subr.mxu0 0.0
    %290 = vmatpush1.xpose.msra.mxu0 0.0
    %291 = vmatprep.subr.mxu0 0.0
    %292 = vmatpush1.xpose.msra.mxu0 0.0
    %293 = vmatprep.subr.mxu0 0.0
    %294 = vmatpush1.xpose.msra.mxu0 0.0
    %295 = vmatprep.subr.mxu0 0.0
    %296 = vmatpush1.xpose.msra.mxu0 0.0
    %297 = vmatprep.subr.mxu0 0.0
    %298 = vmatpush1.xpose.msra.mxu0 0.0
    %299 = vmatprep.subr.mxu0 0.0
    %300 = vmatpush1.xpose.msra.mxu0 0.0
    %301 = vmatprep.subr.mxu0 0.0
    %302 = vmatpush1.xpose.msra.mxu0 0.0
    %303 = vmatprep.subr.mxu0 0.0
    %304 = vmatpush1.xpose.msra.mxu0 0.0
    %305 = vmatprep.subr.mxu0 0.0
    %306 = vmatpush1.xpose.msra.mxu0 0.0
    %307 = vmatprep.subr.mxu0 0.0
    %308 = vmatpush1.xpose.msra.mxu0 0.0
    %309 = vmatprep.subr.mxu0 0.0
    %310 = vmatpush1.xpose.msra.mxu0 0.0
    %311 = vmatprep.mubr.f32.mxu0 0.0
    %312 = vmatmul.mubr.f32.gmra.mrb[0].mxu0 %v152
    %v313 = vpop.f32.mrb[0].mxu0
    %v314 = vadd.f32 %v73, %v313
    %v315 = vpop.f32.mrb[0].mxu0
    %316 = vmatprep.mubr.f32.mxu0 0.0
    %317 = vmatmul.mubr.f32.gmra.mrb[0].mxu0 %v155
    %v318 = vpop.f32.mrb[0].mxu0
    %v319 = vadd.f32 %v78, %v318
    %v320 = vpop.f32.mrb[0].mxu0
    %321 = vmatprep.mubr.f32.mxu0 0.0
    %322 = vmatmul.mubr.f32.gmra.mrb[0].mxu0 %v158
    %v323 = vpop.f32.mrb[0].mxu0
    %v324 = vadd.f32 %v83, %v323
    %v325 = vpop.f32.mrb[0].mxu0
    %326 = vmatprep.mubr.f32.mxu0 0.0
    %327 = vmatmul.mubr.f32.gmra.mrb[0].mxu0 %v161
    %v328 = vpop.f32.mrb[0].mxu0
    %v329 = vadd.f32 %v88, %v328
    %v330 = vpop.f32.mrb[0].mxu0
    %331 = vmatprep.mubr.f32.mxu0 0.0
    %332 = vmatmul.mubr.f32.gmra.mrb[0].mxu0 %v164
    %v333 = vpop.f32.mrb[0].mxu0
    %v334 = vadd.f32 %v93, %v333
    %v335 = vpop.f32.mrb[0].mxu0
    %336 = vmatprep.mubr.f32.mxu0 0.0
    %337 = vmatmul.mubr.f32.gmra.mrb[0].mxu0 %v167
    %v338 = vpop.f32.mrb[0].mxu0
    %v339 = vadd.f32 %v98, %v338
    %v340 = vpop.f32.mrb[0].mxu0
    %341 = vmatprep.mubr.f32.mxu0 0.0
    %342 = vmatmul.mubr.f32.gmra.mrb[0].mxu0 %v170
    %v343 = vpop.f32.mrb[0].mxu0
    %v344 = vadd.f32 %v103, %v343
    %v345 = vpop.f32.mrb[0].mxu0
    %346 = vmatprep.mubr.f32.mxu0 0.0
    %347 = vmatmul.mubr.f32.gmra.mrb[0].mxu0 %v173
    %v348 = vpop.f32.mrb[0].mxu0
    %v349 = vadd.f32 %v108, %v348
    %v350 = vpop.f32.mrb[0].mxu0
    %351 = vmatprep.mubr.f32.mxu0 0.0
    %352 = vmatmul.mubr.f32.gmra.mrb[0].mxu0 %v176
    %v353 = vpop.f32.mrb[0].mxu0
    %v354 = vadd.f32 %v113, %v353
    %v355 = vpop.f32.mrb[0].mxu0
    %356 = vmatprep.mubr.f32.mxu0 0.0
    %357 = vmatmul.mubr.f32.gmra.mrb[0].mxu0 %v179
    %v358 = vpop.f32.mrb[0].mxu0
    %v359 = vadd.f32 %v118, %v358
    %v360 = vpop.f32.mrb[0].mxu0
    %361 = vmatprep.mubr.f32.mxu0 0.0
    %362 = vmatmul.mubr.f32.gmra.mrb[0].mxu0 %v182
    %v363 = vpop.f32.mrb[0].mxu0
    %v364 = vadd.f32 %v123, %v363
    %v365 = vpop.f32.mrb[0].mxu0
    %366 = vmatprep.mubr.f32.mxu0 0.0
    %367 = vmatmul.mubr.f32.gmra.mrb[0].mxu0 %v185
    %v368 = vpop.f32.mrb[0].mxu0
    %v369 = vadd.f32 %v128, %v368
    %v370 = vpop.f32.mrb[0].mxu0
    %371 = vmatprep.mubr.f32.mxu0 0.0
    %372 = vmatmul.mubr.f32.gmra.mrb[0].mxu0 %v188
    %v373 = vpop.f32.mrb[0].mxu0
    %v374 = vadd.f32 %v133, %v373
    %v375 = vpop.f32.mrb[0].mxu0
    %376 = vmatprep.mubr.f32.mxu0 0.0
    %377 = vmatmul.mubr.f32.gmra.mrb[0].mxu0 %v191
    %v378 = vpop.f32.mrb[0].mxu0
    %v379 = vadd.f32 %v138, %v378
    %v380 = vpop.f32.mrb[0].mxu0
    %381 = vmatprep.mubr.f32.mxu0 0.0
    %382 = vmatmul.mubr.f32.gmra.mrb[0].mxu0 %v194
    %v383 = vpop.f32.mrb[0].mxu0
    %v384 = vadd.f32 %v143, %v383
    %v385 = vpop.f32.mrb[0].mxu0
    %386 = vmatprep.mubr.f32.mxu0 0.0
    %387 = vmatmul.mubr.f32.gmra.mrb[0].mxu0 %v197
    %v388 = vpop.f32.mrb[0].mxu0
    %v389 = vadd.f32 %v148, %v388
    %v390 = vpop.f32.mrb[0].mxu0
    %391 = vdwg.mxu0
    %v392 = vmax.f32 %v314, 0.0
    %v393 = vmax.f32 %v319, 0.0
    %v394 = vmax.f32 %v324, 0.0
    %v395 = vmax.f32 %v329, 0.0
    %v396 = vmax.f32 %v334, 0.0
    %v397 = vmax.f32 %v339, 0.0
    %v398 = vmax.f32 %v344, 0.0
    %v399 = vmax.f32 %v349, 0.0
    %v400 = vmax.f32 %v354, 0.0
    %v401 = vmax.f32 %v359, 0.0
    %v402 = vmax.f32 %v364, 0.0
    %v403 = vmax.f32 %v369, 0.0
    %v404 = vmax.f32 %v374, 0.0
    %v405 = vmax.f32 %v379, 0.0
    %v406 = vmax.f32 %v384, 0.0
    %v407 = vmax.f32 %v389, 0.0
    %v408 = vld [vmem:[%s3] sm:$0xff]
    %410 = vset.pattern.permute.xlu0 0
    %411 = vperm.xlu0 %410, %v53
    %v412 = vpop.permute.xlu0 %411
    %414 = vmatprep.subr.mxu0 0.0
    %415 = vmatpush1.msra.mxu0 %v392
    %416 = vmatprep.subr.mxu0 0.0
    %417 = vmatpush1.msra.mxu0 %v393
    %418 = vmatprep.subr.mxu0 0.0
    %419 = vmatpush1.msra.mxu0 %v394
    %420 = vmatprep.subr.mxu0 0.0
    %421 = vmatpush1.msra.mxu0 %v395
    %422 = vmatprep.subr.mxu0 0.0
    %423 = vmatpush1.msra.mxu0 %v396
    %424 = vmatprep.subr.mxu0 0.0
    %425 = vmatpush1.msra.mxu0 %v397
    %426 = vmatprep.subr.mxu0 0.0
    %427 = vmatpush1.msra.mxu0 %v398
    %428 = vmatprep.subr.mxu0 0.0
    %429 = vmatpush1.msra.mxu0 %v399
    %430 = vmatprep.subr.mxu0 0.0
    %431 = vmatpush1.msra.mxu0 %v400
    %432 = vmatprep.subr.mxu0 0.0
    %433 = vmatpush1.msra.mxu0 %v401
    %434 = vmatprep.subr.mxu0 0.0
    %435 = vmatpush1.msra.mxu0 %v402
    %436 = vmatprep.subr.mxu0 0.0
    %437 = vmatpush1.msra.mxu0 %v403
    %438 = vmatprep.subr.mxu0 0.0
    %439 = vmatpush1.msra.mxu0 %v404
    %440 = vmatprep.subr.mxu0 0.0
    %441 = vmatpush1.msra.mxu0 %v405
    %442 = vmatprep.subr.mxu0 0.0
    %443 = vmatpush1.msra.mxu0 %v406
    %444 = vmatprep.subr.mxu0 0.0
    %445 = vmatpush1.msra.mxu0 %v407
    %446 = vmatprep.subr.mxu0 0.0
    %447 = vmatpush1.msra.mxu0 0.0
    %448 = vmatprep.subr.mxu0 0.0
    %449 = vmatpush1.msra.mxu0 0.0
    %450 = vmatprep.subr.mxu0 0.0
    %451 = vmatpush1.msra.mxu0 0.0
    %452 = vmatprep.subr.mxu0 0.0
    %453 = vmatpush1.msra.mxu0 0.0
    %454 = vmatprep.subr.mxu0 0.0
    %455 = vmatpush1.msra.mxu0 0.0
    %456 = vmatprep.subr.mxu0 0.0
    %457 = vmatpush1.msra.mxu0 0.0
    %458 = vmatprep.subr.mxu0 0.0
    %459 = vmatpush1.msra.mxu0 0.0
    %460 = vmatprep.subr.mxu0 0.0
    %461 = vmatpush1.msra.mxu0 0.0
    %462 = vmatprep.subr.mxu0 0.0
    %463 = vmatpush1.msra.mxu0 0.0
    %464 = vmatprep.subr.mxu0 0.0
    %465 = vmatpush1.msra.mxu0 0.0
    %466 = vmatprep.subr.mxu0 0.0
    %467 = vmatpush1.msra.mxu0 0.0
    %468 = vmatprep.subr.mxu0 0.0
    %469 = vmatpush1.msra.mxu0 0.0
    %470 = vmatprep.subr.mxu0 0.0
    %471 = vmatpush1.msra.mxu0 0.0
    %472 = vmatprep.subr.mxu0 0.0
    %473 = vmatpush1.msra.mxu0 0.0
    %474 = vmatprep.subr.mxu0 0.0
    %475 = vmatpush1.msra.mxu0 0.0
    %476 = vmatprep.subr.mxu0 0.0
    %477 = vmatpush1.msra.mxu0 0.0
    %478 = vmatprep.mubr.f32.mxu0 0.0
    %479 = vmatmul.mubr.f32.gmra.mrb[0].mxu0 %v408
    %v480 = vpop.f32.mrb[0].mxu0
    %v481 = vadd.f32 %v412, %v480
    %v482 = vpop.f32.mrb[0].mxu0
    %483 = vdwg.mxu0
    %484 = vst [vmem:[#allocation2] sm:$0xff] %v481
    // Predicated region
    $region22: #{tpu_custom_call.1} parent=1 // pred_check
      _
    $region23: #{tpu_custom_call.1} parent=1 // pred_check_branch
      %486 = sbr.rel (0) target = $region25
    $region24: #{tpu_custom_call.1} parent=1 // pred_region
      %s488 = ssub.s32 128, 128
      %489 = vsyncadd [#allocation3], %s488
      %s491 = sshll.u32 [#allocation2], 4
      %s492 = int_to_ptr.vmem [resolvable:$true] %s491
      %494 = dma.vmem_to_hbm [thread:$0]  %s492, 128, %s5, [#allocation3]
    $region25: #{tpu_custom_call.1} parent=1 // pred_fallthru
      _
    // Predicated region
    $region26: #{tpu_custom_call.1} parent=1 // pred_check
      _
    $region27: #{tpu_custom_call.1} parent=1 // pred_check_branch
      %496 = sbr.rel (0) target = $region29
    $region28: #{tpu_custom_call.1} parent=1 // pred_region
      %497 = dma.done [#allocation3], 128
    $region29: #{tpu_custom_call.1} parent=1 // pred_fallthru
      _
    %498 = vsyncpa [#allocation3], 1

</llo_original>
